<compile_context>
chip_gen: v7x
topology: tpu7x:2x2x1
jax: 0.10.0
libtpu: 0.0.40
codegen_flags: <defaults>
</compile_context>

<pallas_src>
import functools

import jax
import jax.numpy as jnp
from jax.experimental import pallas as pl
from jax.experimental.pallas import tpu as pltpu

NEG_SLOPE = 0.01  # torch.nn.LeakyReLU default


def _leaky_relu(x):
    return jnp.where(x > 0, x, NEG_SLOPE * x)


def mlp_kernel(xt_ref, w1_ref, b1_ref, w2_ref, b2_ref, w3_ref, b3_ref, o_ref):
    # xt_ref: (6, TILE_N)  -- batch on lanes
    # Layer 1: (100, 6) @ (6, TILE_N) + (100, 1)
    h1 = jnp.dot(w1_ref[...], xt_ref[...], preferred_element_type=jnp.float32)
    h1 = _leaky_relu(h1 + b1_ref[...])
    # Layer 2: (50, 100) @ (100, TILE_N) + (50, 1)
    h2 = jnp.dot(w2_ref[...], h1, preferred_element_type=jnp.float32)
    h2 = _leaky_relu(h2 + b2_ref[...])
    # Layer 3: (6, 50) @ (50, TILE_N) + (6, 1)
    y = jnp.dot(w3_ref[...], h2, preferred_element_type=jnp.float32)
    o_ref[...] = (y + b3_ref[...]).astype(o_ref.dtype)


@functools.partial(jax.jit, static_argnames=("tile_n",))
def net_forward(x, params, tile_n=512):
    """Fused 3-layer MLP in a single Pallas kernel, batch-tiled.

    x: (N, 6) float32
    params: dict with w1 (100,6), b1 (100,), w2 (50,100), b2 (50,),
            w3 (6,50), b3 (6,)  -- PyTorch (out, in) layout (used as-is).
    """
    N = x.shape[0]

    # Batch tile: multiple of 128 lanes, capped so tiny batches use one tile.
    # x tile + out tile per buffer = (6+6)*tn*4 B -> even tn=2048 is ~100 KiB
    # per buffer; with double buffering + ~42 KiB of weights this is far
    # under v7x's 32 MiB scoped-VMEM default.
    tn = min(tile_n, 128 * pl.cdiv(N, 128))
    n_pad = tn * pl.cdiv(N, tn)

    # Lane-dense transposed input; pad ragged tail (padded cols sliced off).
    xt = jnp.pad(x.T, ((0, 0), (0, n_pad - N)))          # (6, n_pad)

    w1 = params["w1"]            # (100, 6)   native (out, in) -- no transpose
    b1 = params["b1"][:, None]   # (100, 1)
    w2 = params["w2"]            # (50, 100)
    b2 = params["b2"][:, None]   # (50, 1)
    w3 = params["w3"]            # (6, 50)
    b3 = params["b3"][:, None]   # (6, 1)

    # Weights/biases: whole-array blocks, constant index map -> DMA'd once,
    # VMEM-resident across all batch tiles.
    const = lambda a: pl.BlockSpec(a.shape, lambda i: (0,) * a.ndim)

    yt = pl.pallas_call(
        mlp_kernel,
        out_shape=jax.ShapeDtypeStruct((6, n_pad), jnp.float32),
        grid_spec=pltpu.PrefetchScalarGridSpec(
            num_scalar_prefetch=0,
            grid=(n_pad // tn,),
            in_specs=[
                pl.BlockSpec((6, tn), lambda i: (0, i)),   # x.T batch tile
                const(w1), const(b1),
                const(w2), const(b2),
                const(w3), const(b3),
            ],
            out_specs=pl.BlockSpec((6, tn), lambda i: (0, i)),
        ),
        compiler_params=pltpu.CompilerParams(
            dimension_semantics=("parallel",),
        ),
    )(xt, w1, b1, w2, b2, w3, b3)

    return yt[:, :N].T  # back to (N, 6)


def init_params(key):
    """Deterministic PyTorch-style init (uniform(-1/sqrt(fan_in), 1/sqrt(fan_in)))."""
    def linear(key, out_f, in_f):
        k_w, k_b = jax.random.split(key)
        bound = 1.0 / jnp.sqrt(in_f)
        w = jax.random.uniform(k_w, (out_f, in_f), jnp.float32, -bound, bound)
        b = jax.random.uniform(k_b, (out_f,), jnp.float32, -bound, bound)
        return w, b

    k1, k2, k3 = jax.random.split(key, 3)
    w1, b1 = linear(k1, 100, 6)
    w2, b2 = linear(k2, 50, 100)
    w3, b3 = linear(k3, 6, 50)
    return {"w1": w1, "b1": b1, "w2": w2, "b2": b2, "w3": w3, "b3": b3}


def net_reference(x, p):
    """Pure-JAX reference for correctness checking."""
    h = x @ p["w1"].T + p["b1"]
    h = jnp.where(h > 0, h, NEG_SLOPE * h)
    h = h @ p["w2"].T + p["b2"]
    h = jnp.where(h > 0, h, NEG_SLOPE * h)
    return h @ p["w3"].T + p["b3"]


if __name__ == "__main__":
    key = jax.random.PRNGKey(0)
    k_params, k_x = jax.random.split(key)

    params = init_params(k_params)
    # testPose.npy rows are 6-d pose vectors; use a small synthetic batch.
    x = jax.random.normal(k_x, (8, 6), jnp.float32)

    y = net_forward(x, params)
    y = jax.block_until_ready(y)

    y_ref = net_reference(x, params)
    assert y.shape == (8, 6)
    assert jnp.allclose(y, y_ref, atol=1e-5, rtol=1e-5), "mismatch vs reference"

    # Also exercise a multi-tile, ragged batch to validate the grid path.
    x_big = jax.random.normal(k_x, (1000, 6), jnp.float32)
    y_big = jax.block_until_ready(net_forward(x_big, params))
    assert y_big.shape == (1000, 6)
    assert jnp.allclose(y_big, net_reference(x_big, params), atol=1e-5, rtol=1e-5)

    print("KERNEL_OK")
</pallas_src>

<mosaic_0001>
module attributes {stable_mosaic.version = 11 : i64} {
  func.func @mlp_kernel(%arg0: i32, %arg1: memref<6x128xf32, #tpu.memory_space<vmem>>, %arg2: memref<100x6xf32, #tpu.memory_space<vmem>>, %arg3: memref<100x1xf32, #tpu.memory_space<vmem>>, %arg4: memref<50x100xf32, #tpu.memory_space<vmem>>, %arg5: memref<50x1xf32, #tpu.memory_space<vmem>>, %arg6: memref<6x50xf32, #tpu.memory_space<vmem>>, %arg7: memref<6x1xf32, #tpu.memory_space<vmem>>, %arg8: memref<6x128xf32, #tpu.memory_space<vmem>>) attributes {dimension_semantics = [#tpu.dimension_semantics<parallel>], iteration_bounds = array<i64: 1>, scalar_prefetch = 0 : i64, scratch_operands = 0 : i64, tpu.core_type = #tpu.core_type<tc>, window_params = [{transform_indices = @transform_0, window_bounds = array<i64: 6, 128>}, {pipeline_mode = #tpu.pipeline_mode<synchronous>, transform_indices = @transform_1, window_bounds = array<i64: 100, 6>}, {pipeline_mode = #tpu.pipeline_mode<synchronous>, transform_indices = @transform_2, window_bounds = array<i64: 100, 1>}, {pipeline_mode = #tpu.pipeline_mode<synchronous>, transform_indices = @transform_3, window_bounds = array<i64: 50, 100>}, {pipeline_mode = #tpu.pipeline_mode<synchronous>, transform_indices = @transform_4, window_bounds = array<i64: 50, 1>}, {pipeline_mode = #tpu.pipeline_mode<synchronous>, transform_indices = @transform_5, window_bounds = array<i64: 6, 50>}, {pipeline_mode = #tpu.pipeline_mode<synchronous>, transform_indices = @transform_6, window_bounds = array<i64: 6, 1>}, {transform_indices = @transform_7, window_bounds = array<i64: 6, 128>}]} {
    %c0 = arith.constant 0 : index
    %c0_0 = arith.constant 0 : index
    %0 = vector.load %arg2[%c0, %c0_0] : memref<100x6xf32, #tpu.memory_space<vmem>>, vector<100x6xf32>
    %c0_1 = arith.constant 0 : index
    %c0_2 = arith.constant 0 : index
    %1 = vector.load %arg1[%c0_1, %c0_2] : memref<6x128xf32, #tpu.memory_space<vmem>>, vector<6x128xf32>
    %cst = arith.constant dense<0.000000e+00> : vector<100x128xf32>
    %2 = tpu.matmul %0, %1, %cst {dimension_numbers = #tpu.dot_dimension_numbers<[1], [0], [0], [1], [0, 0, 1, 1], [], []>} : vector<100x6xf32>, vector<6x128xf32>, vector<100x128xf32> -> vector<100x128xf32>
    %c0_3 = arith.constant 0 : index
    %c0_4 = arith.constant 0 : index
    %3 = vector.load %arg3[%c0_3, %c0_4] : memref<100x1xf32, #tpu.memory_space<vmem>>, vector<100x1xf32>
    %4 = vector.broadcast %3 : vector<100x1xf32> to vector<100x128xf32>
    %5 = arith.addf %2, %4 : vector<100x128xf32>
    %cst_5 = arith.constant 0.000000e+00 : f32
    %6 = vector.broadcast %cst_5 : f32 to vector<100x128xf32>
    %7 = arith.cmpf ogt, %5, %6 : vector<100x128xf32>
    %cst_6 = arith.constant 0.00999999977 : f32
    %8 = vector.broadcast %cst_6 : f32 to vector<100x128xf32>
    %9 = arith.mulf %8, %5 : vector<100x128xf32>
    %10 = arith.select %7, %5, %9 : vector<100x128xi1>, vector<100x128xf32>
    %c0_7 = arith.constant 0 : index
    %c0_8 = arith.constant 0 : index
    %11 = vector.load %arg4[%c0_7, %c0_8] : memref<50x100xf32, #tpu.memory_space<vmem>>, vector<50x100xf32>
    %cst_9 = arith.constant dense<0.000000e+00> : vector<50x128xf32>
    %12 = tpu.matmul %11, %10, %cst_9 {dimension_numbers = #tpu.dot_dimension_numbers<[1], [0], [0], [1], [0, 0, 1, 1], [], []>} : vector<50x100xf32>, vector<100x128xf32>, vector<50x128xf32> -> vector<50x128xf32>
    %c0_10 = arith.constant 0 : index
    %c0_11 = arith.constant 0 : index
    %13 = vector.load %arg5[%c0_10, %c0_11] : memref<50x1xf32, #tpu.memory_space<vmem>>, vector<50x1xf32>
    %14 = vector.broadcast %13 : vector<50x1xf32> to vector<50x128xf32>
    %15 = arith.addf %12, %14 : vector<50x128xf32>
    %cst_12 = arith.constant 0.000000e+00 : f32
    %16 = vector.broadcast %cst_12 : f32 to vector<50x128xf32>
    %17 = arith.cmpf ogt, %15, %16 : vector<50x128xf32>
    %cst_13 = arith.constant 0.00999999977 : f32
    %18 = vector.broadcast %cst_13 : f32 to vector<50x128xf32>
    %19 = arith.mulf %18, %15 : vector<50x128xf32>
    %20 = arith.select %17, %15, %19 : vector<50x128xi1>, vector<50x128xf32>
    %c0_14 = arith.constant 0 : index
    %c0_15 = arith.constant 0 : index
    %21 = vector.load %arg6[%c0_14, %c0_15] : memref<6x50xf32, #tpu.memory_space<vmem>>, vector<6x50xf32>
    %cst_16 = arith.constant dense<0.000000e+00> : vector<6x128xf32>
    %22 = tpu.matmul %21, %20, %cst_16 {dimension_numbers = #tpu.dot_dimension_numbers<[1], [0], [0], [1], [0, 0, 1, 1], [], []>} : vector<6x50xf32>, vector<50x128xf32>, vector<6x128xf32> -> vector<6x128xf32>
    %c0_17 = arith.constant 0 : index
    %c0_18 = arith.constant 0 : index
    %23 = vector.load %arg7[%c0_17, %c0_18] : memref<6x1xf32, #tpu.memory_space<vmem>>, vector<6x1xf32>
    %24 = vector.broadcast %23 : vector<6x1xf32> to vector<6x128xf32>
    %25 = arith.addf %22, %24 : vector<6x128xf32>
    %c0_19 = arith.constant 0 : index
    %c0_20 = arith.constant 0 : index
    %26 = vector.load %arg8[%c0_19, %c0_20] : memref<6x128xf32, #tpu.memory_space<vmem>>, vector<6x128xf32>
    tpu.vector_store %arg8[%c0_19, %c0_20], %25 {strides = array<i32>} : memref<6x128xf32, #tpu.memory_space<vmem>>, vector<6x128xf32>,
    return
  }
  func.func @transform_0(%arg0: i32) -> (i32, i32) {
    %c0_i32 = arith.constant 0 : i32
    %c0_i32_0 = arith.constant 0 : i32
    return %c0_i32, %arg0 : i32, i32
  }
  func.func @transform_1(%arg0: i32) -> (i32, i32) {
    %c0_i32 = arith.constant 0 : i32
    %c0_i32_0 = arith.constant 0 : i32
    %c0_i32_1 = arith.constant 0 : i32
    return %c0_i32, %c0_i32_0 : i32, i32
  }
  func.func @transform_2(%arg0: i32) -> (i32, i32) {
    %c0_i32 = arith.constant 0 : i32
    %c0_i32_0 = arith.constant 0 : i32
    %c0_i32_1 = arith.constant 0 : i32
    return %c0_i32, %c0_i32_0 : i32, i32
  }
  func.func @transform_3(%arg0: i32) -> (i32, i32) {
    %c0_i32 = arith.constant 0 : i32
    %c0_i32_0 = arith.constant 0 : i32
    %c0_i32_1 = arith.constant 0 : i32
    return %c0_i32, %c0_i32_0 : i32, i32
  }
  func.func @transform_4(%arg0: i32) -> (i32, i32) {
    %c0_i32 = arith.constant 0 : i32
    %c0_i32_0 = arith.constant 0 : i32
    %c0_i32_1 = arith.constant 0 : i32
    return %c0_i32, %c0_i32_0 : i32, i32
  }
  func.func @transform_5(%arg0: i32) -> (i32, i32) {
    %c0_i32 = arith.constant 0 : i32
    %c0_i32_0 = arith.constant 0 : i32
    %c0_i32_1 = arith.constant 0 : i32
    return %c0_i32, %c0_i32_0 : i32, i32
  }
  func.func @transform_6(%arg0: i32) -> (i32, i32) {
    %c0_i32 = arith.constant 0 : i32
    %c0_i32_0 = arith.constant 0 : i32
    %c0_i32_1 = arith.constant 0 : i32
    return %c0_i32, %c0_i32_0 : i32, i32
  }
  func.func @transform_7(%arg0: i32) -> (i32, i32) {
    %c0_i32 = arith.constant 0 : i32
    %c0_i32_0 = arith.constant 0 : i32
    return %c0_i32, %arg0 : i32, i32
  }
}

</mosaic_0001>

<llo_original>
// kernel: net_forward.1
$region0: #{net_forward.1}
  #allocation0 [shape = 'u32[]', space=smem, size = 0x4, offset = 0x4, fixed_abs, tag = 'smem constant byte address 0x4 - core index']
  #allocation1 [shape = 'u32[144,128]{1,0:T(1,128)}', space=vmem, size = 0x12000, scoped, tag = 'internal scratch']
  %s0 = inlined_call_operand.vmem [shape: f32[6,128], index: 0, kind: input, shape index: {}]
  %s1 = inlined_call_operand.vmem [shape: f32[100,6], index: 1, kind: input, shape index: {}]
  %s2 = inlined_call_operand.vmem [shape: f32[100,1], index: 2, kind: input, shape index: {}]
  %s3 = inlined_call_operand.vmem [shape: f32[50,100], index: 3, kind: input, shape index: {}]
  %s4 = inlined_call_operand.vmem [shape: f32[50,1], index: 4, kind: input, shape index: {}]
  %s5 = inlined_call_operand.vmem [shape: f32[6,50], index: 5, kind: input, shape index: {}]
  %s6 = inlined_call_operand.vmem [shape: f32[6,1], index: 6, kind: input, shape index: {}]
  %s7 = inlined_call_operand.vmem [shape: f32[6,128], index: 7, kind: output, shape index: {}]
  %s8 = sld [smem:[#allocation0]]
  $region38: #{net_forward.1} parent=0
    _
  %s10 = ssub.s32 1, %s8
  %s11 = scalar_select 0, %s10, %s8
  // Predicated region
  $region2: #{net_forward.1} parent=0 // pred_check
    _
  $region3: #{net_forward.1} parent=0 // pred_check_branch
    %13 = sbr.rel (0) target = $region5
  $region4: #{net_forward.1} parent=0 // pred_region
    _
  $region5: #{net_forward.1} parent=0 // pred_fallthru
    _
  // Predicated region
  $region6: #{net_forward.1} parent=0 // pred_check
    _
  $region7: #{net_forward.1} parent=0 // pred_check_branch
    %15 = sbr.rel (0) target = $region9
  $region8: #{net_forward.1} parent=0 // pred_region
    _
  $region9: #{net_forward.1} parent=0 // pred_fallthru
    _
  // Predicated region
  $region10: #{net_forward.1} parent=0 // pred_check
    _
  $region11: #{net_forward.1} parent=0 // pred_check_branch
    %17 = sbr.rel (0) target = $region13
  $region12: #{net_forward.1} parent=0 // pred_region
    _
  $region13: #{net_forward.1} parent=0 // pred_fallthru
    _
  // Predicated region
  $region14: #{net_forward.1} parent=0 // pred_check
    _
  $region15: #{net_forward.1} parent=0 // pred_check_branch
    %19 = sbr.rel (0) target = $region17
  $region16: #{net_forward.1} parent=0 // pred_region
    _
  $region17: #{net_forward.1} parent=0 // pred_fallthru
    _
  // Predicated region
  $region18: #{net_forward.1} parent=0 // pred_check
    _
  $region19: #{net_forward.1} parent=0 // pred_check_branch
    %21 = sbr.rel (0) target = $region21
  $region20: #{net_forward.1} parent=0 // pred_region
    _
  $region21: #{net_forward.1} parent=0 // pred_fallthru
    _
  // Predicated region
  $region22: #{net_forward.1} parent=0 // pred_check
    _
  $region23: #{net_forward.1} parent=0 // pred_check_branch
    %23 = sbr.rel (0) target = $region25
  $region24: #{net_forward.1} parent=0 // pred_region
    _
  $region25: #{net_forward.1} parent=0 // pred_fallthru
    _
  // Predicated region
  $region26: #{net_forward.1} parent=0 // pred_check
    _
  $region27: #{net_forward.1} parent=0 // pred_check_branch
    %25 = sbr.rel (0) target = $region29
  $region28: #{net_forward.1} parent=0 // pred_region
    _
  $region29: #{net_forward.1} parent=0 // pred_fallthru
    _
  %v26 = vld [vmem:[%s1] sm:$0xff]
  %v27 = vld [vmem:[%s1 + $0x8] sm:$0xff]
  %v28 = vld [vmem:[%s1 + $0x10] sm:$0xff]
  %v29 = vld [vmem:[%s1 + $0x18] sm:$0xff]
  %v30 = vld [vmem:[%s1 + $0x20] sm:$0xff]
  %v31 = vld [vmem:[%s1 + $0x28] sm:$0xff]
  %v32 = vld [vmem:[%s1 + $0x30] sm:$0xff]
  %v33 = vld [vmem:[%s1 + $0x38] sm:$0xff]
  %v34 = vld [vmem:[%s1 + $0x40] sm:$0xff]
  %v35 = vld [vmem:[%s1 + $0x48] sm:$0xff]
  %v36 = vld [vmem:[%s1 + $0x50] sm:$0xff]
  %v37 = vld [vmem:[%s1 + $0x58] sm:$0xff]
  %v38 = vld [vmem:[%s1 + $0x60] sm:$0xf]
  %v39 = vld [vmem:[%s0] sm:$0x3f]
  %v40 = vld [vmem:[%s2] sm:$0xff]
  %v41 = vld [vmem:[%s2 + $0x8] sm:$0xff]
  %v42 = vld [vmem:[%s2 + $0x10] sm:$0xff]
  %v43 = vld [vmem:[%s2 + $0x18] sm:$0xff]
  %v44 = vld [vmem:[%s2 + $0x20] sm:$0xff]
  %v45 = vld [vmem:[%s2 + $0x28] sm:$0xff]
  %v46 = vld [vmem:[%s2 + $0x30] sm:$0xff]
  %v47 = vld [vmem:[%s2 + $0x38] sm:$0xff]
  %v48 = vld [vmem:[%s2 + $0x40] sm:$0xff]
  %v49 = vld [vmem:[%s2 + $0x48] sm:$0xff]
  %v50 = vld [vmem:[%s2 + $0x50] sm:$0xff]
  %v51 = vld [vmem:[%s2 + $0x58] sm:$0xff]
  %v52 = vld [vmem:[%s2 + $0x60] sm:$0xf]
  %54 = vset.pattern.permute.xlu0 0
  %55 = vperm.xlu0 %54, %v40
  %v56 = vpop.permute.xlu0 %55
  %59 = vset.pattern.permute.xlu0 0
  %60 = vperm.xlu0 %59, %v41
  %v61 = vpop.permute.xlu0 %60
  %64 = vset.pattern.permute.xlu0 0
  %65 = vperm.xlu0 %64, %v42
  %v66 = vpop.permute.xlu0 %65
  %69 = vset.pattern.permute.xlu0 0
  %70 = vperm.xlu0 %69, %v43
  %v71 = vpop.permute.xlu0 %70
  %74 = vset.pattern.permute.xlu0 0
  %75 = vperm.xlu0 %74, %v44
  %v76 = vpop.permute.xlu0 %75
  %79 = vset.pattern.permute.xlu0 0
  %80 = vperm.xlu0 %79, %v45
  %v81 = vpop.permute.xlu0 %80
  %84 = vset.pattern.permute.xlu0 0
  %85 = vperm.xlu0 %84, %v46
  %v86 = vpop.permute.xlu0 %85
  %89 = vset.pattern.permute.xlu0 0
  %90 = vperm.xlu0 %89, %v47
  %v91 = vpop.permute.xlu0 %90
  %94 = vset.pattern.permute.xlu0 0
  %95 = vperm.xlu0 %94, %v48
  %v96 = vpop.permute.xlu0 %95
  %99 = vset.pattern.permute.xlu0 0
  %100 = vperm.xlu0 %99, %v49
  %v101 = vpop.permute.xlu0 %100
  %104 = vset.pattern.permute.xlu0 0
  %105 = vperm.xlu0 %104, %v50
  %v106 = vpop.permute.xlu0 %105
  %109 = vset.pattern.permute.xlu0 0
  %110 = vperm.xlu0 %109, %v51
  %v111 = vpop.permute.xlu0 %110
  %114 = vset.pattern.permute.xlu0 0
  %115 = vperm.xlu0 %114, %v52
  %v116 = vpop.permute.xlu0 %115
  %vm118 = vcmask 48128
  %v120 = vsel %vm118, %v26, 0
  %v123 = vsel %vm118, %v27, 0
  %v126 = vsel %vm118, %v28, 0
  %v129 = vsel %vm118, %v29, 0
  %v132 = vsel %vm118, %v30, 0
  %v135 = vsel %vm118, %v31, 0
  %v138 = vsel %vm118, %v32, 0
  %v141 = vsel %vm118, %v33, 0
  %v144 = vsel %vm118, %v34, 0
  %v147 = vsel %vm118, %v35, 0
  %v150 = vsel %vm118, %v36, 0
  %v153 = vsel %vm118, %v37, 0
  %v156 = vsel %vm118, %v38, 0
  %vm158 = vcmask 1045504
  %v160 = vsel %vm158, %v39, 0
  %162 = vmatprep.subr.mxu0 0.0
  %163 = vmatpush1.msra.mxu0 %v160
  %164 = vmatprep.subr.mxu0 0.0
  %165 = vmatpush1.msra.mxu0 0.0
  %166 = vmatprep.subr.mxu0 0.0
  %167 = vmatpush1.msra.mxu0 0.0
  %168 = vmatprep.subr.mxu0 0.0
  %169 = vmatpush1.msra.mxu0 0.0
  %170 = vmatprep.subr.mxu0 0.0
  %171 = vmatpush1.msra.mxu0 0.0
  %172 = vmatprep.subr.mxu0 0.0
  %173 = vmatpush1.msra.mxu0 0.0
  %174 = vmatprep.subr.mxu0 0.0
  %175 = vmatpush1.msra.mxu0 0.0
  %176 = vmatprep.subr.mxu0 0.0
  %177 = vmatpush1.msra.mxu0 0.0
  %178 = vmatprep.subr.mxu0 0.0
  %179 = vmatpush1.msra.mxu0 0.0
  %180 = vmatprep.subr.mxu0 0.0
  %181 = vmatpush1.msra.mxu0 0.0
  %182 = vmatprep.subr.mxu0 0.0
  %183 = vmatpush1.msra.mxu0 0.0
  %184 = vmatprep.subr.mxu0 0.0
  %185 = vmatpush1.msra.mxu0 0.0
  %186 = vmatprep.subr.mxu0 0.0
  %187 = vmatpush1.msra.mxu0 0.0
  %188 = vmatprep.subr.mxu0 0.0
  %189 = vmatpush1.msra.mxu0 0.0
  %190 = vmatprep.subr.mxu0 0.0
  %191 = vmatpush1.msra.mxu0 0.0
  %192 = vmatprep.subr.mxu0 0.0
  %193 = vmatpush1.msra.mxu0 0.0
  %194 = vmatprep.subr.mxu0 0.0
  %195 = vmatpush1.msra.mxu0 0.0
  %196 = vmatprep.subr.mxu0 0.0
  %197 = vmatpush1.msra.mxu0 0.0
  %198 = vmatprep.subr.mxu0 0.0
  %199 = vmatpush1.msra.mxu0 0.0
  %200 = vmatprep.subr.mxu0 0.0
  %201 = vmatpush1.msra.mxu0 0.0
  %202 = vmatprep.subr.mxu0 0.0
  %203 = vmatpush1.msra.mxu0 0.0
  %204 = vmatprep.subr.mxu0 0.0
  %205 = vmatpush1.msra.mxu0 0.0
  %206 = vmatprep.subr.mxu0 0.0
  %207 = vmatpush1.msra.mxu0 0.0
  %208 = vmatprep.subr.mxu0 0.0
  %209 = vmatpush1.msra.mxu0 0.0
  %210 = vmatprep.subr.mxu0 0.0
  %211 = vmatpush1.msra.mxu0 0.0
  %212 = vmatprep.subr.mxu0 0.0
  %213 = vmatpush1.msra.mxu0 0.0
  %214 = vmatprep.subr.mxu0 0.0
  %215 = vmatpush1.msra.mxu0 0.0
  %216 = vmatprep.subr.mxu0 0.0
  %217 = vmatpush1.msra.mxu0 0.0
  %218 = vmatprep.subr.mxu0 0.0
  %219 = vmatpush1.msra.mxu0 0.0
  %220 = vmatprep.subr.mxu0 0.0
  %221 = vmatpush1.msra.mxu0 0.0
  %222 = vmatprep.subr.mxu0 0.0
  %223 = vmatpush1.msra.mxu0 0.0
  %224 = vmatprep.subr.mxu0 0.0
  %225 = vmatpush1.msra.mxu0 0.0
  %226 = vmatprep.mubr.f32.mxu0 0.0
  %227 = vmatmul.mubr.f32.gmra.mrb[0].mxu0 %v120
  %v228 = vpop.f32.mrb[0].mxu0
  %v229 = vadd.f32 %v56, %v228
  %v230 = vpop.f32.mrb[0].mxu0
  %231 = vmatprep.mubr.f32.mxu0 0.0
  %232 = vmatmul.mubr.f32.gmra.mrb[0].mxu0 %v123
  %v233 = vpop.f32.mrb[0].mxu0
  %v234 = vadd.f32 %v61, %v233
  %v235 = vpop.f32.mrb[0].mxu0
  %236 = vmatprep.mubr.f32.mxu0 0.0
  %237 = vmatmul.mubr.f32.gmra.mrb[0].mxu0 %v126
  %v238 = vpop.f32.mrb[0].mxu0
  %v239 = vadd.f32 %v66, %v238
  %v240 = vpop.f32.mrb[0].mxu0
  %241 = vmatprep.mubr.f32.mxu0 0.0
  %242 = vmatmul.mubr.f32.gmra.mrb[0].mxu0 %v129
  %v243 = vpop.f32.mrb[0].mxu0
  %v244 = vadd.f32 %v71, %v243
  %v245 = vpop.f32.mrb[0].mxu0
  %246 = vmatprep.mubr.f32.mxu0 0.0
  %247 = vmatmul.mubr.f32.gmra.mrb[0].mxu0 %v132
  %v248 = vpop.f32.mrb[0].mxu0
  %v249 = vadd.f32 %v76, %v248
  %v250 = vpop.f32.mrb[0].mxu0
  %251 = vmatprep.mubr.f32.mxu0 0.0
  %252 = vmatmul.mubr.f32.gmra.mrb[0].mxu0 %v135
  %v253 = vpop.f32.mrb[0].mxu0
  %v254 = vadd.f32 %v81, %v253
  %v255 = vpop.f32.mrb[0].mxu0
  %256 = vmatprep.mubr.f32.mxu0 0.0
  %257 = vmatmul.mubr.f32.gmra.mrb[0].mxu0 %v138
  %v258 = vpop.f32.mrb[0].mxu0
  %v259 = vadd.f32 %v86, %v258
  %v260 = vpop.f32.mrb[0].mxu0
  %261 = vmatprep.mubr.f32.mxu0 0.0
  %262 = vmatmul.mubr.f32.gmra.mrb[0].mxu0 %v141
  %v263 = vpop.f32.mrb[0].mxu0
  %v264 = vadd.f32 %v91, %v263
  %v265 = vpop.f32.mrb[0].mxu0
  %266 = vmatprep.mubr.f32.mxu0 0.0
  %267 = vmatmul.mubr.f32.gmra.mrb[0].mxu0 %v144
  %v268 = vpop.f32.mrb[0].mxu0
  %v269 = vadd.f32 %v96, %v268
  %v270 = vpop.f32.mrb[0].mxu0
  %271 = vmatprep.mubr.f32.mxu0 0.0
  %272 = vmatmul.mubr.f32.gmra.mrb[0].mxu0 %v147
  %v273 = vpop.f32.mrb[0].mxu0
  %v274 = vadd.f32 %v101, %v273
  %v275 = vpop.f32.mrb[0].mxu0
  %276 = vmatprep.mubr.f32.mxu0 0.0
  %277 = vmatmul.mubr.f32.gmra.mrb[0].mxu0 %v150
  %v278 = vpop.f32.mrb[0].mxu0
  %v279 = vadd.f32 %v106, %v278
  %v280 = vpop.f32.mrb[0].mxu0
  %281 = vmatprep.mubr.f32.mxu0 0.0
  %282 = vmatmul.mubr.f32.gmra.mrb[0].mxu0 %v153
  %v283 = vpop.f32.mrb[0].mxu0
  %v284 = vadd.f32 %v111, %v283
  %v285 = vpop.f32.mrb[0].mxu0
  %286 = vmatprep.mubr.f32.mxu0 0.0
  %287 = vmatmul.mubr.f32.gmra.mrb[0].mxu0 %v156
  %v288 = vpop.f32.mrb[0].mxu0
  %v289 = vadd.f32 %v116, %v288
  %v290 = vpop.f32.mrb[0].mxu0
  %291 = vdwg.mxu0
  %vm292 = vcmp.gt.f32.partialorder %v229, 0.0
  %vm293 = vcmp.gt.f32.partialorder %v234, 0.0
  %vm294 = vcmp.gt.f32.partialorder %v239, 0.0
  %vm295 = vcmp.gt.f32.partialorder %v244, 0.0
  %vm296 = vcmp.gt.f32.partialorder %v249, 0.0
  %vm297 = vcmp.gt.f32.partialorder %v254, 0.0
  %vm298 = vcmp.gt.f32.partialorder %v259, 0.0
  %vm299 = vcmp.gt.f32.partialorder %v264, 0.0
  %vm300 = vcmp.gt.f32.partialorder %v269, 0.0
  %vm301 = vcmp.gt.f32.partialorder %v274, 0.0
  %vm302 = vcmp.gt.f32.partialorder %v279, 0.0
  %vm303 = vcmp.gt.f32.partialorder %v284, 0.0
  %vm304 = vcmp.gt.f32.partialorder %v289, 0.0
  %v305 = vmul.f32 %v229, 0.01
  %v306 = vmul.f32 %v234, 0.01
  %v307 = vmul.f32 %v239, 0.01
  %v308 = vmul.f32 %v244, 0.01
  %v309 = vmul.f32 %v249, 0.01
  %v310 = vmul.f32 %v254, 0.01
  %v311 = vmul.f32 %v259, 0.01
  %v312 = vmul.f32 %v264, 0.01
  %v313 = vmul.f32 %v269, 0.01
  %v314 = vmul.f32 %v274, 0.01
  %v315 = vmul.f32 %v279, 0.01
  %v316 = vmul.f32 %v284, 0.01
  %v317 = vmul.f32 %v289, 0.01
  %v318 = vsel %vm292, %v229, %v305
  %v319 = vsel %vm293, %v234, %v306
  %v320 = vsel %vm294, %v239, %v307
  %v321 = vsel %vm295, %v244, %v308
  %v322 = vsel %vm296, %v249, %v309
  %v323 = vsel %vm297, %v254, %v310
  %v324 = vsel %vm298, %v259, %v311
  %v325 = vsel %vm299, %v264, %v312
  %v326 = vsel %vm300, %v269, %v313
  %v327 = vsel %vm301, %v274, %v314
  %v328 = vsel %vm302, %v279, %v315
  %v329 = vsel %vm303, %v284, %v316
  %v330 = vsel %vm304, %v289, %v317
  %v331 = vld [vmem:[%s3] sm:$0xff]
  %v332 = vld [vmem:[%s3 + $0x8] sm:$0xff]
  %v333 = vld [vmem:[%s3 + $0x10] sm:$0xff]
  %v334 = vld [vmem:[%s3 + $0x18] sm:$0xff]
  %v335 = vld [vmem:[%s3 + $0x20] sm:$0xff]
  %v336 = vld [vmem:[%s3 + $0x28] sm:$0xff]
  %v337 = vld [vmem:[%s3 + $0x30] sm:$0x3]
  %v338 = vld [vmem:[%s4] sm:$0xff]
  %v339 = vld [vmem:[%s4 + $0x8] sm:$0xff]
  %v340 = vld [vmem:[%s4 + $0x10] sm:$0xff]
  %v341 = vld [vmem:[%s4 + $0x18] sm:$0xff]
  %v342 = vld [vmem:[%s4 + $0x20] sm:$0xff]
  %v343 = vld [vmem:[%s4 + $0x28] sm:$0xff]
  %v344 = vld [vmem:[%s4 + $0x30] sm:$0x3]
  %346 = vset.pattern.permute.xlu0 0
  %347 = vperm.xlu0 %346, %v338
  %v348 = vpop.permute.xlu0 %347
  %351 = vset.pattern.permute.xlu0 0
  %352 = vperm.xlu0 %351, %v339
  %v353 = vpop.permute.xlu0 %352
  %356 = vset.pattern.permute.xlu0 0
  %357 = vperm.xlu0 %356, %v340
  %v358 = vpop.permute.xlu0 %357
  %361 = vset.pattern.permute.xlu0 0
  %362 = vperm.xlu0 %361, %v341
  %v363 = vpop.permute.xlu0 %362
  %366 = vset.pattern.permute.xlu0 0
  %367 = vperm.xlu0 %366, %v342
  %v368 = vpop.permute.xlu0 %367
  %371 = vset.pattern.permute.xlu0 0
  %372 = vperm.xlu0 %371, %v343
  %v373 = vpop.permute.xlu0 %372
  %376 = vset.pattern.permute.xlu0 0
  %377 = vperm.xlu0 %376, %v344
  %v378 = vpop.permute.xlu0 %377
  %vm380 = vcmask 818176
  %v382 = vsel %vm380, %v331, 0
  %v385 = vsel %vm380, %v332, 0
  %v388 = vsel %vm380, %v333, 0
  %v391 = vsel %vm380, %v334, 0
  %v394 = vsel %vm380, %v335, 0
  %v397 = vsel %vm380, %v336, 0
  %v400 = vsel %vm380, %v337, 0
  %vm402 = vcmask 1043456
  %v404 = vsel %vm402, %v330, 0
  %406 = vmatprep.subr.mxu0 0.0
  %407 = vmatpush1.msra.mxu0 %v318
  %408 = vmatprep.subr.mxu0 0.0
  %409 = vmatpush1.msra.mxu0 %v319
  %410 = vmatprep.subr.mxu0 0.0
  %411 = vmatpush1.msra.mxu0 %v320
  %412 = vmatprep.subr.mxu0 0.0
  %413 = vmatpush1.msra.mxu0 %v321
  %414 = vmatprep.subr.mxu0 0.0
  %415 = vmatpush1.msra.mxu0 %v322
  %416 = vmatprep.subr.mxu0 0.0
  %417 = vmatpush1.msra.mxu0 %v323
  %418 = vmatprep.subr.mxu0 0.0
  %419 = vmatpush1.msra.mxu0 %v324
  %420 = vmatprep.subr.mxu0 0.0
  %421 = vmatpush1.msra.mxu0 %v325
  %422 = vmatprep.subr.mxu0 0.0
  %423 = vmatpush1.msra.mxu0 %v326
  %424 = vmatprep.subr.mxu0 0.0
  %425 = vmatpush1.msra.mxu0 %v327
  %426 = vmatprep.subr.mxu0 0.0
  %427 = vmatpush1.msra.mxu0 %v328
  %428 = vmatprep.subr.mxu0 0.0
  %429 = vmatpush1.msra.mxu0 %v329
  %430 = vmatprep.subr.mxu0 0.0
  %431 = vmatpush1.msra.mxu0 %v404
  %432 = vmatprep.subr.mxu0 0.0
  %433 = vmatpush1.msra.mxu0 0.0
  %434 = vmatprep.subr.mxu0 0.0
  %435 = vmatpush1.msra.mxu0 0.0
  %436 = vmatprep.subr.mxu0 0.0
  %437 = vmatpush1.msra.mxu0 0.0
  %438 = vmatprep.subr.mxu0 0.0
  %439 = vmatpush1.msra.mxu0 0.0
  %440 = vmatprep.subr.mxu0 0.0
  %441 = vmatpush1.msra.mxu0 0.0
  %442 = vmatprep.subr.mxu0 0.0
  %443 = vmatpush1.msra.mxu0 0.0
  %444 = vmatprep.subr.mxu0 0.0
  %445 = vmatpush1.msra.mxu0 0.0
  %446 = vmatprep.subr.mxu0 0.0
  %447 = vmatpush1.msra.mxu0 0.0
  %448 = vmatprep.subr.mxu0 0.0
  %449 = vmatpush1.msra.mxu0 0.0
  %450 = vmatprep.subr.mxu0 0.0
  %451 = vmatpush1.msra.mxu0 0.0
  %452 = vmatprep.subr.mxu0 0.0
  %453 = vmatpush1.msra.mxu0 0.0
  %454 = vmatprep.subr.mxu0 0.0
  %455 = vmatpush1.msra.mxu0 0.0
  %456 = vmatprep.subr.mxu0 0.0
  %457 = vmatpush1.msra.mxu0 0.0
  %458 = vmatprep.subr.mxu0 0.0
  %459 = vmatpush1.msra.mxu0 0.0
  %460 = vmatprep.subr.mxu0 0.0
  %461 = vmatpush1.msra.mxu0 0.0
  %462 = vmatprep.subr.mxu0 0.0
  %463 = vmatpush1.msra.mxu0 0.0
  %464 = vmatprep.subr.mxu0 0.0
  %465 = vmatpush1.msra.mxu0 0.0
  %466 = vmatprep.subr.mxu0 0.0
  %467 = vmatpush1.msra.mxu0 0.0
  %468 = vmatprep.subr.mxu0 0.0
  %469 = vmatpush1.msra.mxu0 0.0
  %470 = vmatprep.mubr.f32.mxu0 0.0
  %471 = vmatmul.mubr.f32.gmra.mrb[0].mxu0 %v382
  %v472 = vpop.f32.mrb[0].mxu0
  %v473 = vadd.f32 %v348, %v472
  %v474 = vpop.f32.mrb[0].mxu0
  %475 = vmatprep.mubr.f32.mxu0 0.0
  %476 = vmatmul.mubr.f32.gmra.mrb[0].mxu0 %v385
  %v477 = vpop.f32.mrb[0].mxu0
  %v478 = vadd.f32 %v353, %v477
  %v479 = vpop.f32.mrb[0].mxu0
  %480 = vmatprep.mubr.f32.mxu0 0.0
  %481 = vmatmul.mubr.f32.gmra.mrb[0].mxu0 %v388
  %v482 = vpop.f32.mrb[0].mxu0
  %v483 = vadd.f32 %v358, %v482
  %v484 = vpop.f32.mrb[0].mxu0
  %485 = vmatprep.mubr.f32.mxu0 0.0
  %486 = vmatmul.mubr.f32.gmra.mrb[0].mxu0 %v391
  %v487 = vpop.f32.mrb[0].mxu0
  %v488 = vadd.f32 %v363, %v487
  %v489 = vpop.f32.mrb[0].mxu0
  %490 = vmatprep.mubr.f32.mxu0 0.0
  %491 = vmatmul.mubr.f32.gmra.mrb[0].mxu0 %v394
  %v492 = vpop.f32.mrb[0].mxu0
  %v493 = vadd.f32 %v368, %v492
  %v494 = vpop.f32.mrb[0].mxu0
  %495 = vmatprep.mubr.f32.mxu0 0.0
  %496 = vmatmul.mubr.f32.gmra.mrb[0].mxu0 %v397
  %v497 = vpop.f32.mrb[0].mxu0
  %v498 = vadd.f32 %v373, %v497
  %v499 = vpop.f32.mrb[0].mxu0
  %500 = vmatprep.mubr.f32.mxu0 0.0
  %501 = vmatmul.mubr.f32.gmra.mrb[0].mxu0 %v400
  %v502 = vpop.f32.mrb[0].mxu0
  %v503 = vadd.f32 %v378, %v502
  %v504 = vpop.f32.mrb[0].mxu0
  %505 = vdwg.mxu0
  %vm506 = vcmp.gt.f32.partialorder %v473, 0.0
  %vm507 = vcmp.gt.f32.partialorder %v478, 0.0
  %vm508 = vcmp.gt.f32.partialorder %v483, 0.0
  %vm509 = vcmp.gt.f32.partialorder %v488, 0.0
  %vm510 = vcmp.gt.f32.partialorder %v493, 0.0
  %vm511 = vcmp.gt.f32.partialorder %v498, 0.0
  %vm512 = vcmp.gt.f32.partialorder %v503, 0.0
  %v513 = vmul.f32 %v473, 0.01
  %v514 = vmul.f32 %v478, 0.01
  %v515 = vmul.f32 %v483, 0.01
  %v516 = vmul.f32 %v488, 0.01
  %v517 = vmul.f32 %v493, 0.01
  %v518 = vmul.f32 %v498, 0.01
  %v519 = vmul.f32 %v503, 0.01
  %v520 = vsel %vm506, %v473, %v513
  %v521 = vsel %vm507, %v478, %v514
  %v522 = vsel %vm508, %v483, %v515
  %v523 = vsel %vm509, %v488, %v516
  %v524 = vsel %vm510, %v493, %v517
  %v525 = vsel %vm511, %v498, %v518
  %v526 = vsel %vm512, %v503, %v519
  %v527 = vld [vmem:[%s5] sm:$0x3f]
  %v528 = vld [vmem:[%s6] sm:$0x3f]
  %530 = vset.pattern.permute.xlu0 0
  %531 = vperm.xlu0 %530, %v528
  %v532 = vpop.permute.xlu0 %531
  %vm534 = vcmask 408576
  %v536 = vsel %vm534, %v527, 0
  %vm538 = vcmask 1041408
  %v540 = vsel %vm538, %v526, 0
  %542 = vmatprep.subr.mxu0 0.0
  %543 = vmatpush1.msra.mxu0 %v520
  %544 = vmatprep.subr.mxu0 0.0
  %545 = vmatpush1.msra.mxu0 %v521
  %546 = vmatprep.subr.mxu0 0.0
  %547 = vmatpush1.msra.mxu0 %v522
  %548 = vmatprep.subr.mxu0 0.0
  %549 = vmatpush1.msra.mxu0 %v523
  %550 = vmatprep.subr.mxu0 0.0
  %551 = vmatpush1.msra.mxu0 %v524
  %552 = vmatprep.subr.mxu0 0.0
  %553 = vmatpush1.msra.mxu0 %v525
  %554 = vmatprep.subr.mxu0 0.0
  %555 = vmatpush1.msra.mxu0 %v540
  %556 = vmatprep.subr.mxu0 0.0
  %557 = vmatpush1.msra.mxu0 0.0
  %558 = vmatprep.subr.mxu0 0.0
  %559 = vmatpush1.msra.mxu0 0.0
  %560 = vmatprep.subr.mxu0 0.0
  %561 = vmatpush1.msra.mxu0 0.0
  %562 = vmatprep.subr.mxu0 0.0
  %563 = vmatpush1.msra.mxu0 0.0
  %564 = vmatprep.subr.mxu0 0.0
  %565 = vmatpush1.msra.mxu0 0.0
  %566 = vmatprep.subr.mxu0 0.0
  %567 = vmatpush1.msra.mxu0 0.0
  %568 = vmatprep.subr.mxu0 0.0
  %569 = vmatpush1.msra.mxu0 0.0
  %570 = vmatprep.subr.mxu0 0.0
  %571 = vmatpush1.msra.mxu0 0.0
  %572 = vmatprep.subr.mxu0 0.0
  %573 = vmatpush1.msra.mxu0 0.0
  %574 = vmatprep.subr.mxu0 0.0
  %575 = vmatpush1.msra.mxu0 0.0
  %576 = vmatprep.subr.mxu0 0.0
  %577 = vmatpush1.msra.mxu0 0.0
  %578 = vmatprep.subr.mxu0 0.0
  %579 = vmatpush1.msra.mxu0 0.0
  %580 = vmatprep.subr.mxu0 0.0
  %581 = vmatpush1.msra.mxu0 0.0
  %582 = vmatprep.subr.mxu0 0.0
  %583 = vmatpush1.msra.mxu0 0.0
  %584 = vmatprep.subr.mxu0 0.0
  %585 = vmatpush1.msra.mxu0 0.0
  %586 = vmatprep.subr.mxu0 0.0
  %587 = vmatpush1.msra.mxu0 0.0
  %588 = vmatprep.subr.mxu0 0.0
  %589 = vmatpush1.msra.mxu0 0.0
  %590 = vmatprep.subr.mxu0 0.0
  %591 = vmatpush1.msra.mxu0 0.0
  %592 = vmatprep.subr.mxu0 0.0
  %593 = vmatpush1.msra.mxu0 0.0
  %594 = vmatprep.subr.mxu0 0.0
  %595 = vmatpush1.msra.mxu0 0.0
  %596 = vmatprep.subr.mxu0 0.0
  %597 = vmatpush1.msra.mxu0 0.0
  %598 = vmatprep.subr.mxu0 0.0
  %599 = vmatpush1.msra.mxu0 0.0
  %600 = vmatprep.subr.mxu0 0.0
  %601 = vmatpush1.msra.mxu0 0.0
  %602 = vmatprep.subr.mxu0 0.0
  %603 = vmatpush1.msra.mxu0 0.0
  %604 = vmatprep.subr.mxu0 0.0
  %605 = vmatpush1.msra.mxu0 0.0
  %606 = vmatprep.mubr.f32.mxu0 0.0
  %607 = vmatmul.mubr.f32.gmra.mrb[0].mxu0 %v536
  %v608 = vpop.f32.mrb[0].mxu0
  %v609 = vadd.f32 %v532, %v608
  %v610 = vpop.f32.mrb[0].mxu0
  %611 = vdwg.mxu0
  %612 = vst [vmem:[%s7] sm:$0x3f] %v609
  // Predicated region
  $region30: #{net_forward.1} parent=0 // pred_check
    _
  $region31: #{net_forward.1} parent=0 // pred_check_branch
    %614 = sbr.rel (0) target = $region33
  $region32: #{net_forward.1} parent=0 // pred_region
    _
  $region33: #{net_forward.1} parent=0 // pred_fallthru
    _
  // Predicated region
  $region34: #{net_forward.1} parent=0 // pred_check
    _
  $region35: #{net_forward.1} parent=0 // pred_check_branch
    %616 = sbr.rel (0) target = $region37
  $region36: #{net_forward.1} parent=0 // pred_region
    _
  $region37: #{net_forward.1} parent=0 // pred_fallthru
    _

</llo_original>
